<compile_context>
chip_gen: v5e
topology: v5e:2x2
jax: 0.10.0
libtpu: 0.0.40
codegen_flags: <defaults>
</compile_context>

<pallas_src>
import functools

import jax
import jax.numpy as jnp
from jax.experimental import pallas as pl
from jax.experimental.pallas import tpu as pltpu

# DiceLoss.__init__ defaults
P = 2
SMOOTH = 1.0
IGNORE_LB = 255
# weight=None, reduction='mean'

LANES = 128                              # TPU vreg lane count
_BLOCK_BUDGET_BYTES = 4 * 1024 * 1024    # per logits VMEM buffer (x2 double buffered)


def _dice_kernel(logits_ref, label_ref, out_ref, numer_acc, denom_acc,
                 *, tile_hw, hw_true, needs_mask):
    # logits_ref: (1, C, TILE_HW) float ; label_ref: (1, 1, TILE_HW) int8
    # out_ref:    (1, C, 1) f32         ; numer_acc/denom_acc: (C, 1) f32 VMEM
    hw_step = pl.program_id(1)

    @pl.when(hw_step == 0)
    def _init():
        numer_acc[...] = jnp.zeros_like(numer_acc)
        denom_acc[...] = jnp.zeros_like(denom_acc)

    logits = logits_ref[0].astype(jnp.float32)          # (C, TILE_HW)
    label = label_ref[0].astype(jnp.int32)              # (1, TILE_HW); ignore/pad == -1

    C = logits.shape[0]
    probs = jax.nn.sigmoid(logits)                      # (C, TILE_HW)

    # one-hot(label) without materializing it: ignored / padded pixels carry
    # label -1, which never matches a channel id.
    ch = jax.lax.broadcasted_iota(jnp.int32, (C, tile_hw), 0)
    match = ch == label                                 # (C, TILE_HW) bool
    one_hot = match.astype(jnp.float32)                 # == one_hot ** p (0/1 valued)

    if P == 2:
        probs_p = probs * probs
    elif P == 1:
        probs_p = probs
    else:
        probs_p = probs ** P

    if needs_mask:
        # Mask the padded tail of the spatial axis (sigmoid(0)=0.5 on padding
        # would otherwise inflate the denominator).
        pos = hw_step * tile_hw + jax.lax.broadcasted_iota(
            jnp.int32, (1, tile_hw), 1)
        probs_p = jnp.where(pos < hw_true, probs_p, 0.0)

    numer_acc[...] += jnp.sum(jnp.where(match, probs, 0.0), axis=1, keepdims=True)
    denom_acc[...] += jnp.sum(probs_p + one_hot, axis=1, keepdims=True)

    @pl.when(hw_step == pl.num_programs(1) - 1)
    def _finalize():
        numer = numer_acc[...]                          # (C, 1)
        denom = denom_acc[...]                          # (C, 1)
        out_ref[0, :, :] = 1.0 - (2.0 * numer + SMOOTH) / (denom + SMOOTH)


def _pick_tile_hw(C, hw_padded, itemsize):
    """Largest lane-multiple spatial tile whose logits block fits the budget."""
    t = _BLOCK_BUDGET_BYTES // max(1, C * itemsize)
    t = max(LANES, (t // LANES) * LANES)   # multiple of 128 lanes
    t = min(t, 512 * 1024)                 # keep per-step reduce work bounded
    return hw_padded if t >= hw_padded else t


def dice_loss(logits, label, *, tile_hw=None):
    """Pallas DiceLoss forward. logits: (N, C, H, W) float; label: (N, H, W) int."""
    N, C, H, W = logits.shape
    HW = H * W
    hw128 = ((HW + LANES - 1) // LANES) * LANES
    itemsize = jnp.dtype(logits.dtype).itemsize
    if tile_hw is None:
        tile_hw = _pick_tile_hw(C, hw128, itemsize)
    assert tile_hw % LANES == 0
    num_hw = (hw128 + tile_hw - 1) // tile_hw
    hw_total = num_hw * tile_hw
    pad = hw_total - HW

    # Logits streamed in native dtype (no extra f32 up-cast pass over HBM).
    x = logits.reshape(N, C, HW)
    # Labels carried as int8 (ignore_lb -> -1 never matches a class id).
    # Assumes C <= 127, true for segmentation heads.
    lab = label.reshape(N, HW)
    lab = jnp.where(lab == IGNORE_LB, -1, lab).astype(jnp.int8)
    if pad:
        x = jnp.pad(x, ((0, 0), (0, 0), (0, pad)))
        lab = jnp.pad(lab, ((0, 0), (0, pad)), constant_values=-1)
    lab = lab.reshape(N, 1, hw_total)

    kernel = functools.partial(_dice_kernel, tile_hw=tile_hw, hw_true=HW,
                               needs_mask=(pad != 0))

    per_class = pl.pallas_call(
        kernel,
        out_shape=jax.ShapeDtypeStruct((N, C, 1), jnp.float32),
        grid_spec=pltpu.PrefetchScalarGridSpec(
            num_scalar_prefetch=0,
            grid=(N, num_hw),
            in_specs=[
                pl.BlockSpec((1, C, tile_hw), lambda n, h: (n, 0, h)),
                pl.BlockSpec((1, 1, tile_hw), lambda n, h: (n, 0, h)),
            ],
            out_specs=pl.BlockSpec((1, C, 1), lambda n, h: (n, 0, 0)),
            scratch_shapes=[
                pltpu.VMEM((C, 1), jnp.float32),   # numer accumulator
                pltpu.VMEM((C, 1), jnp.float32),   # denom accumulator
            ],
        ),
        compiler_params=pltpu.CompilerParams(
            dimension_semantics=("parallel", "arbitrary"),
            vmem_limit_bytes=32 * 1024 * 1024,
        ),
    )(x, lab)

    loss = per_class[..., 0]                       # (N, C)
    # weight is None, reduction == 'mean' (module defaults): tiny glue reduction.
    return loss.sum(axis=1).mean()


def _dice_loss_ref(logits, label):
    """Pure-JAX reference mirroring the PyTorch forward."""
    N, C, H, W = logits.shape
    ignore = label == IGNORE_LB
    lab = jnp.where(ignore, 0, label)
    one_hot = jax.nn.one_hot(lab, C, axis=1, dtype=jnp.float32)   # (N, C, H, W)
    one_hot = jnp.where(ignore[:, None, :, :], 0.0, one_hot)
    probs = jax.nn.sigmoid(logits.astype(jnp.float32))
    numer = jnp.sum(probs * one_hot, axis=(2, 3))
    denom = jnp.sum(probs ** P + one_hot ** P, axis=(2, 3))
    loss = 1.0 - (2.0 * numer + SMOOTH) / (denom + SMOOTH)
    return loss.sum(axis=1).mean()


if __name__ == "__main__":
    key = jax.random.PRNGKey(0)

    def make_inputs(k, N, C, H, W):
        k1, k2, k3 = jax.random.split(k, 3)
        logits = jax.random.normal(k1, (N, C, H, W), dtype=jnp.float32)
        label = jax.random.randint(k2, (N, H, W), 0, C, dtype=jnp.int32)
        ignore_mask = jax.random.bernoulli(k3, 0.1, (N, H, W))
        label = jnp.where(ignore_mask, IGNORE_LB, label)
        return logits, label

    k0, k1, k2 = jax.random.split(key, 3)

    # primary test shape (N=2, C=4, 16x16)
    logits, label = make_inputs(k0, 2, 4, 16, 16)
    out = jax.block_until_ready(dice_loss(logits, label))
    ref = _dice_loss_ref(logits, label)
    assert jnp.allclose(out, ref, atol=1e-5, rtol=1e-5), (out, ref)

    # spatial size not a multiple of 128 -> exercises the padded-tail mask
    logits, label = make_inputs(k1, 2, 3, 10, 10)
    out = jax.block_until_ready(dice_loss(logits, label))
    ref = _dice_loss_ref(logits, label)
    assert jnp.allclose(out, ref, atol=1e-5, rtol=1e-5), (out, ref)

    # force several HW tiles -> exercises the multi-step accumulator path
    logits, label = make_inputs(k2, 2, 4, 32, 32)
    out = jax.block_until_ready(dice_loss(logits, label, tile_hw=128))
    ref = _dice_loss_ref(logits, label)
    assert jnp.allclose(out, ref, atol=1e-5, rtol=1e-5), (out, ref)

    print("KERNEL_OK")
</pallas_src>

<mosaic_0001>
module attributes {stable_mosaic.version = 11 : i64} {
  func.func @_dice_kernel(%arg0: i32, %arg1: i32, %arg2: memref<1x4x256xf32, #tpu.memory_space<vmem>>, %arg3: memref<1x1x256xi8, #tpu.memory_space<vmem>>, %arg4: memref<1x4x1xf32, #tpu.memory_space<vmem>>, %arg5: memref<4x1xf32, #tpu.memory_space<vmem>>, %arg6: memref<4x1xf32, #tpu.memory_space<vmem>>) attributes {dimension_semantics = [#tpu.dimension_semantics<parallel>, #tpu.dimension_semantics<arbitrary>], iteration_bounds = array<i64: 2, 1>, scalar_prefetch = 0 : i64, scratch_operands = 2 : i64, tpu.core_type = #tpu.core_type<tc>, window_params = [{transform_indices = @transform_0, window_bounds = array<i64: 1, 4, 256>}, {transform_indices = @transform_1, window_bounds = array<i64: 1, 1, 256>}, {transform_indices = @transform_2, window_bounds = array<i64: 1, 4, 1>}]} {
    %c0_i32 = arith.constant 0 : i32
    %0 = arith.cmpi eq, %arg1, %c0_i32 : i32
    %1 = arith.extui %0 : i1 to i32
    %c0_i32_0 = arith.constant 0 : i32
    %2 = arith.cmpi ne, %1, %c0_i32_0 : i32
    scf.if %2 {
      %cst_19 = arith.constant 0.000000e+00 : f32
      %35 = vector.broadcast %cst_19 : f32 to vector<4x1xf32>
      %c0_20 = arith.constant 0 : index
      %c0_21 = arith.constant 0 : index
      %36 = vector.load %arg5[%c0_20, %c0_21] : memref<4x1xf32, #tpu.memory_space<vmem>>, vector<4x1xf32>
      tpu.vector_store %arg5[%c0_20, %c0_21], %35 {strides = array<i32>} : memref<4x1xf32, #tpu.memory_space<vmem>>, vector<4x1xf32>,
      %cst_22 = arith.constant 0.000000e+00 : f32
      %37 = vector.broadcast %cst_22 : f32 to vector<4x1xf32>
      %c0_23 = arith.constant 0 : index
      %c0_24 = arith.constant 0 : index
      %38 = vector.load %arg6[%c0_23, %c0_24] : memref<4x1xf32, #tpu.memory_space<vmem>>, vector<4x1xf32>
      tpu.vector_store %arg6[%c0_23, %c0_24], %37 {strides = array<i32>} : memref<4x1xf32, #tpu.memory_space<vmem>>, vector<4x1xf32>,
    } else {
    }
    %c0 = arith.constant 0 : index
    %c0_1 = arith.constant 0 : index
    %c0_2 = arith.constant 0 : index
    %3 = vector.load %arg2[%c0, %c0_1, %c0_2] : memref<1x4x256xf32, #tpu.memory_space<vmem>>, vector<1x4x256xf32>
    %4 = vector.shape_cast %3 : vector<1x4x256xf32> to vector<4x256xf32>
    %c0_3 = arith.constant 0 : index
    %c0_4 = arith.constant 0 : index
    %c0_5 = arith.constant 0 : index
    %5 = vector.load %arg3[%c0_3, %c0_4, %c0_5] : memref<1x1x256xi8, #tpu.memory_space<vmem>>, vector<1x1x256xi8>
    %6 = vector.shape_cast %5 : vector<1x1x256xi8> to vector<1x256xi8>
    %7 = arith.extsi %6 : vector<1x256xi8> to vector<1x256xi32>
    %8 = arith.negf %4 : vector<4x256xf32>
    %9 = math.exp %8 : vector<4x256xf32>
    %cst = arith.constant 1.000000e+00 : f32
    %10 = vector.broadcast %cst : f32 to vector<4x256xf32>
    %11 = arith.addf %10, %9 : vector<4x256xf32>
    %12 = arith.divf %10, %11 : vector<4x256xf32>
    %13 = tpu.iota {dimensions = array<i32: 0>} : vector<4x256xi32>
    %14 = vector.broadcast %7 : vector<1x256xi32> to vector<4x256xi32>
    %15 = arith.cmpi eq, %13, %14 : vector<4x256xi32>
    %16 = arith.extui %15 : vector<4x256xi1> to vector<4x256xi32>
    %17 = arith.sitofp %16 : vector<4x256xi32> to vector<4x256xf32>
    %18 = arith.mulf %12, %12 : vector<4x256xf32>
    %c0_6 = arith.constant 0 : index
    %c0_7 = arith.constant 0 : index
    %19 = vector.load %arg5[%c0_6, %c0_7] : memref<4x1xf32, #tpu.memory_space<vmem>>, vector<4x1xf32>
    %cst_8 = arith.constant 0.000000e+00 : f32
    %20 = vector.broadcast %cst_8 : f32 to vector<4x256xf32>
    %21 = arith.select %15, %12, %20 : vector<4x256xi1>, vector<4x256xf32>
    %cst_9 = arith.constant dense<0.000000e+00> : vector<4xf32>
    %22 = vector.multi_reduction <add>, %21, %cst_9 [1] : vector<4x256xf32> to vector<4xf32>
    %23 = vector.shape_cast %22 : vector<4xf32> to vector<4x1xf32>
    %24 = arith.addf %19, %23 : vector<4x1xf32>
    %c0_10 = arith.constant 0 : index
    %c0_11 = arith.constant 0 : index
    %25 = vector.load %arg5[%c0_10, %c0_11] : memref<4x1xf32, #tpu.memory_space<vmem>>, vector<4x1xf32>
    tpu.vector_store %arg5[%c0_10, %c0_11], %24 {strides = array<i32>} : memref<4x1xf32, #tpu.memory_space<vmem>>, vector<4x1xf32>,
    %c0_12 = arith.constant 0 : index
    %c0_13 = arith.constant 0 : index
    %26 = vector.load %arg6[%c0_12, %c0_13] : memref<4x1xf32, #tpu.memory_space<vmem>>, vector<4x1xf32>
    %27 = arith.addf %18, %17 : vector<4x256xf32>
    %cst_14 = arith.constant dense<0.000000e+00> : vector<4xf32>
    %28 = vector.multi_reduction <add>, %27, %cst_14 [1] : vector<4x256xf32> to vector<4xf32>
    %29 = vector.shape_cast %28 : vector<4xf32> to vector<4x1xf32>
    %30 = arith.addf %26, %29 : vector<4x1xf32>
    %c0_15 = arith.constant 0 : index
    %c0_16 = arith.constant 0 : index
    %31 = vector.load %arg6[%c0_15, %c0_16] : memref<4x1xf32, #tpu.memory_space<vmem>>, vector<4x1xf32>
    tpu.vector_store %arg6[%c0_15, %c0_16], %30 {strides = array<i32>} : memref<4x1xf32, #tpu.memory_space<vmem>>, vector<4x1xf32>,
    %c0_i32_17 = arith.constant 0 : i32
    %32 = arith.cmpi eq, %arg1, %c0_i32_17 : i32
    %33 = arith.extui %32 : i1 to i32
    %c0_i32_18 = arith.constant 0 : i32
    %34 = arith.cmpi ne, %33, %c0_i32_18 : i32
    scf.if %34 {
      %c0_19 = arith.constant 0 : index
      %c0_20 = arith.constant 0 : index
      %35 = vector.load %arg5[%c0_19, %c0_20] : memref<4x1xf32, #tpu.memory_space<vmem>>, vector<4x1xf32>
      %c0_21 = arith.constant 0 : index
      %c0_22 = arith.constant 0 : index
      %36 = vector.load %arg6[%c0_21, %c0_22] : memref<4x1xf32, #tpu.memory_space<vmem>>, vector<4x1xf32>
      %cst_23 = arith.constant 2.000000e+00 : f32
      %37 = vector.broadcast %cst_23 : f32 to vector<4x1xf32>
      %38 = arith.mulf %37, %35 : vector<4x1xf32>
      %cst_24 = arith.constant 1.000000e+00 : f32
      %39 = vector.broadcast %cst_24 : f32 to vector<4x1xf32>
      %40 = arith.addf %38, %39 : vector<4x1xf32>
      %cst_25 = arith.constant 1.000000e+00 : f32
      %41 = vector.broadcast %cst_25 : f32 to vector<4x1xf32>
      %42 = arith.addf %36, %41 : vector<4x1xf32>
      %43 = arith.divf %40, %42 : vector<4x1xf32>
      %cst_26 = arith.constant 1.000000e+00 : f32
      %44 = vector.broadcast %cst_26 : f32 to vector<4x1xf32>
      %45 = arith.subf %44, %43 : vector<4x1xf32>
      %c0_27 = arith.constant 0 : index
      %c0_28 = arith.constant 0 : index
      %c0_29 = arith.constant 0 : index
      %46 = vector.load %arg4[%c0_27, %c0_28, %c0_29] : memref<1x4x1xf32, #tpu.memory_space<vmem>>, vector<1x4x1xf32>
      %47 = vector.shape_cast %46 : vector<1x4x1xf32> to vector<4x1xf32>
      %48 = vector.shape_cast %45 : vector<4x1xf32> to vector<1x4x1xf32>
      tpu.vector_store %arg4[%c0_27, %c0_28, %c0_29], %48 {strides = array<i32>} : memref<1x4x1xf32, #tpu.memory_space<vmem>>, vector<1x4x1xf32>,
    } else {
    }
    return
  }
  func.func @transform_0(%arg0: i32, %arg1: i32) -> (i32, i32, i32) {
    %c0_i32 = arith.constant 0 : i32
    %c0_i32_0 = arith.constant 0 : i32
    return %arg0, %c0_i32, %arg1 : i32, i32, i32
  }
  func.func @transform_1(%arg0: i32, %arg1: i32) -> (i32, i32, i32) {
    %c0_i32 = arith.constant 0 : i32
    %c0_i32_0 = arith.constant 0 : i32
    return %arg0, %c0_i32, %arg1 : i32, i32, i32
  }
  func.func @transform_2(%arg0: i32, %arg1: i32) -> (i32, i32, i32) {
    %c0_i32 = arith.constant 0 : i32
    %c0_i32_0 = arith.constant 0 : i32
    %c0_i32_1 = arith.constant 0 : i32
    return %arg0, %c0_i32, %c0_i32_0 : i32, i32, i32
  }
}

</mosaic_0001>

<llo_original>
// kernel: tpu_custom_call.1
$region0: #{tpu_custom_call.1}
  #allocation0 [shape = 'u32[]', space=smem, size = 0x4, offset = 0x4, fixed_abs, tag = 'smem constant byte address 0x4 - core index']
  #allocation1 [shape = 'u32[72,128]{1,0:T(1,128)}', space=vmem, size = 0x9000, scoped, tag = 'internal scratch']
  #allocation2 [shape = 'f32[4,1]{1,0:T(4,128)}', space=vmem, size = 0x800, scoped, tag = 'scratch operand']
  #allocation3 [shape = 'f32[4,1]{1,0:T(4,128)}', space=vmem, size = 0x800, scoped, tag = 'scratch operand']
  %s0 = inlined_call_operand.hbm [shape: f32[2,4,256], index: 0, kind: input, shape index: {}]
  %s1 = inlined_call_operand.vmem [shape: s8[2,1,256], index: 1, kind: input, shape index: {}]
  %s2 = inlined_call_operand.vmem [shape: f32[2,4,1], index: 2, kind: output, shape index: {}]
  %s3 = sld [smem:[#allocation0]]
  $region53: #{tpu_custom_call.1} parent=0
    _
  %s5 = ssub.s32 1, %s3
  %s6 = scalar_select 0, %s5, %s3
  $region1: #{tpu_custom_call.1} parent=0
    #allocation4 [shape = 'u8[8192]{0}', space=vmem, size = 0x2000, scoped, tag = 'input window, operand 0']
    #allocation5 [shape = 's32[2]{0}', space=sflag, size = 0x8, scoped, tag = 'scoped memory for tpu_custom_call.1']
    %7 = vsyncpa [#allocation5], 0
    %s8 = scalar_lea.sflag [#allocation5], 1
    %9 = vsyncpa %s8, 0
    loop: start=0, step=1, limit=4
    $region2: #{tpu_custom_call.1} parent=1 // loop_pre_header
      _
    $region3: #{tpu_custom_call.1} parent=1 // loop_header
      %s11 = sphi 0, %s15
      %p12 = scmp.ge.s32.totalorder %s11, 4
      %s18 = sphi 0, %s30
      %s19 = sphi 0, %s26
      %s20 = sphi 0, %s18
      %s21 = sphi 0, %s19
      %s22 = sphi 0, %s20
      %s23 = sphi 0, %s21
      %s35 = sphi 0, %s37
      %s38 = sphi 0, %s35
      %s39 = sphi 0, %s38
      %s55 = sphi 0, %s39
      %s63 = sphi 0, %s65
      %s66 = sphi 0, %s63
      %s67 = sphi 0, %s66
      %s83 = sphi 0, %s67
      %s89 = sphi 0, %s91
      %s92 = sphi 0, %s89
      %s93 = sphi 0, %s92
      %s109 = sphi 0, %s93
    $region4: #{tpu_custom_call.1} parent=1 // loop_header_branch
      %14 = sbr.rel (%p12) target = $region8
    $region5: #{tpu_custom_call.1} parent=1 // loop_body
      %s16 = ssub.s32 %s11, 1
      %s17 = ssub.s32 %s11, 2
      %s24 = sadd.s32 1, %s19
      %p25 = scmp.ge.s32.totalorder %s24, 1
      %s26 = scalar_select %p25, 0, %s24
      %s27 = sadd.s32 1, %s18
      %s28 = scalar_select %p25, %s27, %s18
      %p29 = scmp.ge.s32.totalorder %s28, 2
      %s30 = scalar_select %p29, 0, %s28
      %s31 = ssub.s32 %s18, %s30
      %s32 = ssub.s32 %s19, %s26
      %s33 = sor.u32 %s31, %s32
      %p34 = scmp.eq.s32.totalorder %s33, 0
      %s36 = sadd.s32 %s35, 1
      %s37 = scalar_select %p34, %s35, %s36
      %p40 = pneg %p34
      %p41 = scmp.eq.s32.totalorder %s11, 1
      %p42 = por %p40, %p41
      %p43 = scmp.ne.s32.totalorder %s35, %s38
      %p44 = scmp.eq.s32.totalorder %s11, 0
      %p45 = por %p43, %p44
      %p46 = scmp.ne.s32.totalorder %s35, %s38
      %p47 = scmp.eq.s32.totalorder %s16, 1
      %p48 = por %p46, %p47
      %p49 = scmp.ne.s32.totalorder %s38, %s39
      %p50 = scmp.eq.s32.totalorder %s16, 0
      %p51 = por %p49, %p50
      %p52 = scmp.ne.s32.totalorder %s38, %s39
      %p53 = scmp.eq.s32.totalorder %s17, 1
      %p54 = por %p52, %p53
      %p56 = scmp.ne.s32.totalorder %s39, %s55
      %p57 = scmp.eq.s32.totalorder %s17, 0
      %p58 = por %p56, %p57
      %s59 = ssub.s32 %s18, %s30
      %s60 = ssub.s32 %s19, %s26
      %s61 = sor.u32 %s59, %s60
      %p62 = scmp.eq.s32.totalorder %s61, 0
      %s64 = sadd.s32 %s63, 1
      %s65 = scalar_select %p62, %s63, %s64
      %p68 = pneg %p62
      %p69 = scmp.eq.s32.totalorder %s11, 1
      %p70 = por %p68, %p69
      %p71 = scmp.ne.s32.totalorder %s63, %s66
      %p72 = scmp.eq.s32.totalorder %s11, 0
      %p73 = por %p71, %p72
      %p74 = scmp.ne.s32.totalorder %s63, %s66
      %p75 = scmp.eq.s32.totalorder %s16, 1
      %p76 = por %p74, %p75
      %p77 = scmp.ne.s32.totalorder %s66, %s67
      %p78 = scmp.eq.s32.totalorder %s16, 0
      %p79 = por %p77, %p78
      %p80 = scmp.ne.s32.totalorder %s66, %s67
      %p81 = scmp.eq.s32.totalorder %s17, 1
      %p82 = por %p80, %p81
      %p84 = scmp.ne.s32.totalorder %s67, %s83
      %p85 = scmp.eq.s32.totalorder %s17, 0
      %p86 = por %p84, %p85
      %s87 = ssub.s32 %s18, %s30
      %p88 = scmp.eq.s32.totalorder %s87, 0
      %s90 = sadd.s32 %s89, 1
      %s91 = scalar_select %p88, %s89, %s90
      %p94 = pneg %p88
      %p95 = scmp.eq.s32.totalorder %s11, 1
      %p96 = por %p94, %p95
      %p97 = scmp.ne.s32.totalorder %s89, %s92
      %p98 = scmp.eq.s32.totalorder %s11, 0
      %p99 = por %p97, %p98
      %p100 = scmp.ne.s32.totalorder %s89, %s92
      %p101 = scmp.eq.s32.totalorder %s16, 1
      %p102 = por %p100, %p101
      %p103 = scmp.ne.s32.totalorder %s92, %s93
      %p104 = scmp.eq.s32.totalorder %s16, 0
      %p105 = por %p103, %p104
      %p106 = scmp.ne.s32.totalorder %s92, %s93
      %p107 = scmp.eq.s32.totalorder %s17, 1
      %p108 = por %p106, %p107
      %p110 = scmp.ne.s32.totalorder %s93, %s109
      %p111 = scmp.eq.s32.totalorder %s17, 0
      %p112 = por %p110, %p111
      %p113 = scmp.le.s32.totalorder 1, %s11
      %p114 = scmp.lt.s32.totalorder %s11, 3
      %p115 = pnand %p113, %p114
      %p116 = pneg %p115
      // Predicated region
      $region9: #{tpu_custom_call.1} parent=5 // pred_check
        _
      $region10: #{tpu_custom_call.1} parent=5 // pred_check_branch
        %118 = sbr.rel (%p115) target = $region12
      $region11: #{tpu_custom_call.1} parent=5 // pred_region
        %s119 = ssub.s32 %s11, 1
      $region12: #{tpu_custom_call.1} parent=5 // pred_fallthru
        _
      %p120 = scmp.lt.s32.totalorder %s11, 2
      // Predicated region
      $region13: #{tpu_custom_call.1} parent=5 // pred_check
        %p121 = pneg %p120
      $region14: #{tpu_custom_call.1} parent=5 // pred_check_branch
        %123 = sbr.rel (%p121) target = $region16
      $region15: #{tpu_custom_call.1} parent=5 // pred_region
        // Predicated region
        $region17: #{tpu_custom_call.1} parent=15 // pred_check
          %p124 = pneg %p45
        $region18: #{tpu_custom_call.1} parent=15 // pred_check_branch
          %126 = sbr.rel (%p124) target = $region20
        $region19: #{tpu_custom_call.1} parent=15 // pred_region
          %s127 = sand.u32 %s35, 1
          %s128 = scalar_lea.sflag [#allocation5], %s127
          %s129 = sand.u32 %s35, 1
          %s130 = smul.addr %s129, 8
          %s131 = scalar_lea.vmem [#allocation4], %s130
          %s132 = smul.u32 2, %s19
          %134 = vsyncadd %s128, 0
          %s135 = smul.addr %s18, 2
          %s136 = sadd.s32 %s132, %s135
          %s137 = smul.addr %s136, 4
          %s138 = scalar_lea.hbm %s0, %s137
          %s140 = sshll.u32 %s138, 4
          %s141 = int_to_ptr.hbm [resolvable:$true] %s140
          %s142 = sshll.u32 %s131, 4
          %s143 = int_to_ptr.vmem [resolvable:$true] %s142
          %145 = dma.hbm_to_vmem [thread:$0]  %s141, 128, %s143, %s128
        $region20: #{tpu_custom_call.1} parent=15 // pred_fallthru
          _
        // Predicated region
        $region21: #{tpu_custom_call.1} parent=15 // pred_check
          %p146 = pneg %p73
        $region22: #{tpu_custom_call.1} parent=15 // pred_check_branch
          %148 = sbr.rel (%p146) target = $region24
        $region23: #{tpu_custom_call.1} parent=15 // pred_region
          %s149 = smul.u32 2, %s19
          %p150 = scmp.lt.s32.totalorder %s18, 1
          %s151 = scalar_select %p150, %s18, 1
          %p152 = scmp.lt.s32.totalorder %s149, 1
          %s153 = scalar_select %p152, %s149, 1
          %s154 = smul.addr %s151, 2
          %s155 = sadd.s32 %s153, %s154
          %s156 = scalar_lea.vmem %s1, %s155
          %s157 = smul.u32 2, %s19
        $region24: #{tpu_custom_call.1} parent=15 // pred_fallthru
          _
      $region16: #{tpu_custom_call.1} parent=5 // pred_fallthru
        _
      %p158 = scmp.le.s32.totalorder 1, %s11
      %p159 = scmp.lt.s32.totalorder %s11, 3
      %p160 = pnand %p158, %p159
      %p161 = pneg %p160
      // Predicated region
      $region25: #{tpu_custom_call.1} parent=5 // pred_check
        _
      $region26: #{tpu_custom_call.1} parent=5 // pred_check_branch
        %163 = sbr.rel (%p160) target = $region28
      $region27: #{tpu_custom_call.1} parent=5 // pred_region
        %s164 = ssub.s32 %s11, 1
        %s165 = sand.u32 %s38, 1
        %s166 = scalar_lea.sflag [#allocation5], %s165
        %s167 = sand.u32 %s38, 1
        %s168 = smul.addr %s167, 8
        %s169 = scalar_lea.vmem [#allocation4], %s168
        // Predicated region
        $region29: #{tpu_custom_call.1} parent=27 // pred_check
          %p170 = pneg %p51
        $region30: #{tpu_custom_call.1} parent=27 // pred_check_branch
          %172 = sbr.rel (%p170) target = $region32
        $region31: #{tpu_custom_call.1} parent=27 // pred_region
          %174 = dma.done %s166, 128
        $region32: #{tpu_custom_call.1} parent=27 // pred_fallthru
          _
        %s175 = sand.u32 %s38, 1
        %s176 = scalar_lea.sflag [#allocation5], %s175
        %s177 = sand.u32 %s38, 1
        %s178 = smul.addr %s177, 8
        %s179 = scalar_lea.vmem [#allocation4], %s178
        %p180 = pneg %p51
        %p181 = pneg %p48
        %s182 = smul.u32 2, %s21
        %p183 = scmp.lt.s32.totalorder %s20, 1
        %s184 = scalar_select %p183, %s20, 1
        %p185 = scmp.lt.s32.totalorder %s182, 1
        %s186 = scalar_select %p185, %s182, 1
        %s187 = smul.addr %s184, 2
        %s188 = sadd.s32 %s186, %s187
        %s189 = scalar_lea.vmem %s1, %s188
        %p190 = pneg %p79
        %p191 = pneg %p76
        %p192 = pneg %p105
        %p193 = pneg %p102
        %p194 = scmp.lt.s32.totalorder %s20, 1
        %s195 = scalar_select %p194, %s20, 1
        %s196 = smul.addr %s195, 4
        %s197 = scalar_lea.vmem %s2, %s196
        %s198 = smul.u32 2, %s21
        %s199 = smul.u32 2, %s21
        %p200 = scmp.lt.s32.totalorder %s20, 1
        %s201 = scalar_select %p200, %s20, 1
        %p202 = scmp.lt.s32.totalorder %s199, 1
        %s203 = scalar_select %p202, %s199, 1
        %s204 = smul.addr %s201, 2
        %s205 = sadd.s32 %s203, %s204
        %s206 = scalar_lea.vmem %s1, %s205
        %s207 = smul.u32 2, %s21
        %p208 = scmp.lt.s32.totalorder %s20, 1
        %s209 = scalar_select %p208, %s20, 1
        %s210 = smul.addr %s209, 4
        %s211 = scalar_lea.vmem %s2, %s210
        %p212 = scmp.eq.s32.totalorder %s21, 0
        // Predicated region
        $region33: #{tpu_custom_call.1} parent=27 // pred_check
          %p213 = pneg %p212
        $region34: #{tpu_custom_call.1} parent=27 // pred_check_branch
          %215 = sbr.rel (%p213) target = $region36
        $region35: #{tpu_custom_call.1} parent=27 // pred_region
          %vm216 = vcmask 3072
          %217 = vst.msk [vmem:[#allocation2] sm:$0xf] %vm216, 0.0
          %218 = vst.msk [vmem:[#allocation3] sm:$0xf] %vm216, 0.0
        $region36: #{tpu_custom_call.1} parent=27 // pred_fallthru
          _
        %v219 = vld [vmem:[%s169] sm:$0xff]
        %v220 = vld [vmem:[%s206] sm:$0x3]
        %v221 = vunpack.c.0.s8 %v220
        %v222 = vxor.u32 %v219, 2147483648
        %v223 = vmul.f32 %v222, 1.442695
        %v224 = vpow.pop %v223
        %v225 = vadd.f32 %v224, 1.0
        %v226 = vrcp.pop %v225
        %v227 = vmul.f32 %v225, %v226
        %v228 = vsub.f32 1.0, %v227
        %v229 = vmul.f32 %v226, %v228
        %v230 = vadd.f32 %v226, %v229
        %vm231 = vweird.f32 %v225
        %vm232 = vweird.f32 %v226
        %vm233 = vmor %vm231, %vm232
        %v234 = vsel %vm233, %v226, %v230
        %v235 = vand.u32 2147483647, %v225
        %vm236 = vcmp.eq.f32.partialorder %v235, 8.507059e+37
        %v237 = vand.u32 %v225, 2147483648
        %v238 = vor.u32 1.1754944e-38, %v237
        %v239 = vsel %vm236, %v238, %v234
        %v240 = vmul.f32 1.0, %v239
        %v241 = vlaneseq
        %v242 = vshrl.u32 %v241, 7
        %v243 = vperm.slane %v221, 0
        %v244 = vperm.slane %v221, 4
        %v245 = vperm.slane %v243, 0
        %v246 = vperm.slane %v244, 0
        %vm247 = vcmp.eq.s32.totalorder %v242, %v245
        %vm248 = vcmp.eq.s32.totalorder %v242, %v246
        %v249 = vsel %vm247, 1, 0
        %v250 = vsel %vm248, 1, 0
        %v251 = vcvt.s32.f32 %v249
        %v252 = vcvt.s32.f32 %v250
        %v253 = vmul.f32 %v240, %v240
        %v254 = vld [vmem:[#allocation2] sm:$0xf]
        %256 = vst [vmem:[#allocation1] ss:$2 sm:$0xff] %v240
        %v257 = vld.sshfl [vmem:[#allocation1] sm:$0xff pattern:$0x75316420]
        %v258 = vld.sshfl [vmem:[#allocation1 + $0x8] sm:$0xff pattern:$0x75316420]
        %v261 = vsel %vm247, %v257, 0.0
        %v262 = vsel %vm248, %v258, 0.0
        %vm263 = vcmask 1043456
        %v264 = vsel %vm263, %v261, 0.0
        %v265 = vsel %vm263, %v262, 0.0
        %v266 = vadd.f32 %v264, %v265
        %267 = vadd.xlane.f32.xlu0 %v266
        %v268 = vpop.xlane.xlu0 %267
        %v269 = vadd.f32 %v254, %v268
        %vm270 = vcmask 3072
        %271 = vst.msk [vmem:[#allocation2] sm:$0xf] %vm270, %v269
        %v272 = vld [vmem:[#allocation3] sm:$0xf]
        %v275 = vrot.slane %v252, 4
        %v276 = vsel %vm263, %v251, %v275
        %v278 = vadd.f32 %v253, %v276
        %280 = vst [vmem:[#allocation1] ss:$2 sm:$0xff] %v278
        %v281 = vld.sshfl [vmem:[#allocation1] sm:$0xff pattern:$0x75316420]
        %v282 = vld.sshfl [vmem:[#allocation1 + $0x8] sm:$0xff pattern:$0x75316420]
        %v285 = vsel %vm263, %v281, 0.0
        %v286 = vsel %vm263, %v282, 0.0
        %v287 = vadd.f32 %v285, %v286
        %288 = vadd.xlane.f32.xlu0 %v287
        %v289 = vpop.xlane.xlu0 %288
        %v290 = vadd.f32 %v272, %v289
        %291 = vst.msk [vmem:[#allocation3] sm:$0xf] %vm270, %v290
        // Predicated region
        $region37: #{tpu_custom_call.1} parent=27 // pred_check
          %p292 = pneg %p212
        $region38: #{tpu_custom_call.1} parent=27 // pred_check_branch
          %294 = sbr.rel (%p292) target = $region40
        $region39: #{tpu_custom_call.1} parent=27 // pred_region
          %v295 = vld [vmem:[#allocation2] sm:$0xf]
          %v296 = vld [vmem:[#allocation3] sm:$0xf]
          %v297 = vmul.f32 %v295, 2.0
          %v298 = vadd.f32 %v297, 1.0
          %v299 = vadd.f32 %v296, 1.0
          %v300 = vrcp.pop %v299
          %v301 = vmul.f32 %v299, %v300
          %v302 = vsub.f32 1.0, %v301
          %v303 = vmul.f32 %v300, %v302
          %v304 = vadd.f32 %v300, %v303
          %vm305 = vweird.f32 %v299
          %vm306 = vweird.f32 %v300
          %vm307 = vmor %vm305, %vm306
          %v308 = vsel %vm307, %v300, %v304
          %v309 = vand.u32 2147483647, %v299
          %vm310 = vcmp.eq.f32.partialorder %v309, 8.507059e+37
          %v311 = vand.u32 %v299, 2147483648
          %v312 = vor.u32 1.1754944e-38, %v311
          %v313 = vsel %vm310, %v312, %v308
          %v314 = vmul.f32 %v298, %v313
          %v315 = vsub.f32 1.0, %v314
          %316 = vst.msk [vmem:[%s211] sm:$0xf] %vm270, %v315
        $region40: #{tpu_custom_call.1} parent=27 // pred_fallthru
          _
        %p317 = scmp.lt.s32.totalorder %s20, 1
        %s318 = scalar_select %p317, %s20, 1
        %s319 = smul.addr %s318, 4
        %s320 = scalar_lea.vmem %s2, %s319
        // Predicated region
        $region41: #{tpu_custom_call.1} parent=27 // pred_check
          %p321 = pneg %p102
        $region42: #{tpu_custom_call.1} parent=27 // pred_check_branch
          %323 = sbr.rel (%p321) target = $region44
        $region43: #{tpu_custom_call.1} parent=27 // pred_region
          _
        $region44: #{tpu_custom_call.1} parent=27 // pred_fallthru
          _
      $region28: #{tpu_custom_call.1} parent=5 // pred_fallthru
        _
      %p324 = scmp.le.s32.totalorder 2, %s11
      // Predicated region
      $region45: #{tpu_custom_call.1} parent=5 // pred_check
        %p325 = pneg %p324
      $region46: #{tpu_custom_call.1} parent=5 // pred_check_branch
        %327 = sbr.rel (%p325) target = $region48
      $region47: #{tpu_custom_call.1} parent=5 // pred_region
        %s328 = ssub.s32 %s11, 2
        // Predicated region
        $region49: #{tpu_custom_call.1} parent=47 // pred_check
          %p329 = pneg %p108
        $region50: #{tpu_custom_call.1} parent=47 // pred_check_branch
          %331 = sbr.rel (%p329) target = $region52
        $region51: #{tpu_custom_call.1} parent=47 // pred_region
          %p332 = scmp.lt.s32.totalorder %s22, 1
          %s333 = scalar_select %p332, %s22, 1
          %s334 = smul.addr %s333, 4
          %s335 = scalar_lea.vmem %s2, %s334
        $region52: #{tpu_custom_call.1} parent=47 // pred_fallthru
          _
      $region48: #{tpu_custom_call.1} parent=5 // pred_fallthru
        _
    $region6: #{tpu_custom_call.1} parent=1 // loop_footer
      %s15 = sadd.s32 1, %s11
    $region7: #{tpu_custom_call.1} parent=1 // loop_footer_branch
      %10 = sbr.rel target = $region3
    $region8: #{tpu_custom_call.1} parent=1 // loop_exit
      _
    %336 = vsyncpa [#allocation5], 1
    %s337 = scalar_lea.sflag [#allocation5], 1
    %338 = vsyncpa %s337, 1

</llo_original>
